<compile_context>
chip_gen: v6e
topology: v6e:2x2x1
jax: 0.10.0
libtpu: 0.0.40
codegen_flags: <defaults>
</compile_context>

<pallas_src>
import functools

import jax
import jax.numpy as jnp
from jax.experimental import pallas as pl
from jax.experimental.pallas import tpu as pltpu


def _make_kernel(tile_n, n_true, spp, inv_n, needs_mask):
    """Builds the fused multi-task-loss kernel for fixed static sizes."""

    def kernel(iv_ref, poi_ref, ivt_ref, poit_ref,
               dp_ref, dt_ref, tp_ref, tt_ref, out_ref):
        s = pl.program_id(0)        # parallel split (v7x megacore)
        i = pl.program_id(1)        # reduction step over row tiles

        @pl.when(i == 0)
        def _init():
            out_ref[...] = jnp.zeros_like(out_ref)

        if needs_mask:
            row0 = (s * spp + i) * tile_n
            rows = row0 + jax.lax.broadcasted_iota(jnp.int32, (tile_n, 1), 0)
            valid = rows < n_true
        else:
            valid = None

        def masked_col_sum(per_row):                 # (tile_n, 1) -> (1, 1)
            if valid is not None:
                per_row = jnp.where(valid, per_row, 0.0)
            return jnp.sum(per_row, axis=0, keepdims=True)

        def ce_partial(logits_ref, tgt_ref):
            # Single shifted-logits pass: the row max cancels between lse and
            # the picked logit, so only log(sum(exp(shifted))) - picked_shifted
            # is needed.
            logits = logits_ref[...].astype(jnp.float32)          # (tn, C)
            m = jnp.max(logits, axis=1, keepdims=True)             # (tn, 1)
            shifted = logits - m                                   # (tn, C)
            sumexp = jnp.sum(jnp.exp(shifted), axis=1, keepdims=True)
            cls = jax.lax.broadcasted_iota(jnp.int32, shifted.shape, 1)
            picked = jnp.sum(
                jnp.where(cls == tgt_ref[...], shifted, 0.0),
                axis=1, keepdims=True)                             # (tn, 1)
            return masked_col_sum(jnp.log(sumexp) - picked)        # (1, 1)

        def l1_partial(p_ref, t_ref):
            diff = jnp.abs(p_ref[...].astype(jnp.float32)
                           - t_ref[...].astype(jnp.float32))       # (tn, 1)
            return masked_col_sum(diff)                            # (1, 1)

        iv_p = ce_partial(iv_ref, ivt_ref)
        poi_p = ce_partial(poi_ref, poit_ref)
        d_p = l1_partial(dp_ref, dt_ref)
        t_p = l1_partial(tp_ref, tt_ref)

        # Pack the 4 per-tile partial sums into lanes 0..3 of the accumulator.
        lane = jax.lax.broadcasted_iota(jnp.int32, out_ref.shape, 2)
        out_ref[...] += (jnp.where(lane == 0, iv_p, 0.0)
                         + jnp.where(lane == 1, d_p, 0.0)
                         + jnp.where(lane == 2, t_p, 0.0)
                         + jnp.where(lane == 3, poi_p, 0.0))

        @pl.when(i == spp - 1)
        def _finalize():
            out_ref[...] = out_ref[...] * inv_n

    return kernel


@functools.partial(jax.jit, static_argnames=("max_tile_rows",))
def multi_task_loss(is_visited_pred, is_visited_true,
                    distance_pred, distance_true,
                    time_interval_pred, time_interval_true,
                    next_poi_pred, next_poi_true,
                    *, max_tile_rows=None):
    """Returns (is_visited_loss, distance_loss, time_interval_loss, next_poi_loss)."""
    n, c_iv = is_visited_pred.shape
    c_poi = next_poi_pred.shape[1]

    # ---- tile sizing (VMEM-aware, conservative lane-padded estimate) -------
    def lane_pad(c):
        return ((c + 127) // 128) * 128

    row_bytes = (lane_pad(c_poi) * jnp.dtype(next_poi_pred.dtype).itemsize
                 + lane_pad(c_iv) * jnp.dtype(is_visited_pred.dtype).itemsize
                 + 6 * 128 * 4)                       # 4 regression + 2 target cols
    budget = 8 * 1024 * 1024                          # per pipeline buffer
    cap = max(8, budget // row_bytes)
    if max_tile_rows is not None:
        cap = min(cap, int(max_tile_rows))

    if n <= cap:
        tile_n, tiles = n, 1
    else:
        tile_n = max(8, (cap // 8) * 8)
        tiles = -(-n // tile_n)

    # Split the row-tiles across 2 "parallel" chunks (v7x has 2 TensorCores;
    # on 1-TC chips this is just a serial loop with negligible overhead).
    n_splits = 2 if tiles >= 2 else 1
    tiles = -(-tiles // n_splits) * n_splits
    spp = tiles // n_splits
    n_pad = tiles * tile_n

    # ---- metadata-only reshapes (no wrapper-side packing / upcasting) ------
    def pad_rows(x):
        if n_pad == n:
            return x
        return jnp.pad(x, [(0, n_pad - n)] + [(0, 0)] * (x.ndim - 1))

    iv_logits = pad_rows(is_visited_pred)                       # native dtype
    poi_logits = pad_rows(next_poi_pred)                        # native dtype
    iv_tgt = pad_rows(is_visited_true.reshape(-1, 1).astype(jnp.int32))
    poi_tgt = pad_rows(next_poi_true.reshape(-1, 1).astype(jnp.int32))
    d_pred = pad_rows(distance_pred.reshape(-1, 1))
    d_true = pad_rows(distance_true.reshape(-1, 1))
    t_pred = pad_rows(time_interval_pred.reshape(-1, 1))
    t_true = pad_rows(time_interval_true.reshape(-1, 1))

    kernel = _make_kernel(tile_n=tile_n, n_true=n, spp=spp,
                          inv_n=1.0 / n, needs_mask=(n_pad != n))

    row_map = lambda s, i: (s * spp + i, 0)

    out = pl.pallas_call(
        kernel,
        grid=(n_splits, spp),
        in_specs=[
            pl.BlockSpec((tile_n, c_iv), row_map),
            pl.BlockSpec((tile_n, c_poi), row_map),
            pl.BlockSpec((tile_n, 1), row_map),
            pl.BlockSpec((tile_n, 1), row_map),
            pl.BlockSpec((tile_n, 1), row_map),
            pl.BlockSpec((tile_n, 1), row_map),
            pl.BlockSpec((tile_n, 1), row_map),
            pl.BlockSpec((tile_n, 1), row_map),
        ],
        out_specs=pl.BlockSpec((1, 8, 128), lambda s, i: (s, 0, 0)),
        out_shape=jax.ShapeDtypeStruct((n_splits, 8, 128), jnp.float32),
        compiler_params=pltpu.CompilerParams(
            dimension_semantics=("parallel", "arbitrary"),
            vmem_limit_bytes=32 * 1024 * 1024),
    )(iv_logits, poi_logits, iv_tgt, poi_tgt, d_pred, d_true, t_pred, t_true)

    # Sum the per-split partial losses (each already scaled by 1/N).
    res = jnp.sum(out[:, 0, :4], axis=0)
    return res[0], res[1], res[2], res[3]


def multi_task_loss_ref(is_visited_pred, is_visited_true,
                        distance_pred, distance_true,
                        time_interval_pred, time_interval_true,
                        next_poi_pred, next_poi_true):
    def ce(logits, tgt):
        ls = jax.nn.log_softmax(logits.astype(jnp.float32), axis=-1)
        return -jnp.mean(jnp.take_along_axis(
            ls, tgt.reshape(-1, 1).astype(jnp.int32), axis=-1))

    return (ce(is_visited_pred, is_visited_true),
            jnp.mean(jnp.abs(distance_pred - distance_true)),
            jnp.mean(jnp.abs(time_interval_pred - time_interval_true)),
            ce(next_poi_pred, next_poi_true))


def _make_inputs(key, n, c_visited, c_poi):
    ks = jax.random.split(key, 8)
    return (jax.random.normal(ks[0], (n, c_visited), jnp.float32),
            jax.random.randint(ks[1], (n,), 0, c_visited, jnp.int32),
            jax.random.uniform(ks[2], (n,), jnp.float32, 0.0, 5.0),
            jax.random.uniform(ks[3], (n,), jnp.float32, 0.0, 5.0),
            jax.random.uniform(ks[4], (n,), jnp.float32, 0.0, 3.0),
            jax.random.uniform(ks[5], (n,), jnp.float32, 0.0, 3.0),
            jax.random.normal(ks[6], (n, c_poi), jnp.float32),
            jax.random.randint(ks[7], (n,), 0, c_poi, jnp.int32))


if __name__ == "__main__":
    key = jax.random.PRNGKey(0)
    k1, k2 = jax.random.split(key)

    # Case 1: small shapes, single tile / single split.
    args1 = _make_inputs(k1, n=8, c_visited=2, c_poi=32)
    out1 = jax.block_until_ready(multi_task_loss(*args1))
    ref1 = multi_task_loss_ref(*args1)
    for o, r in zip(out1, ref1):
        assert jnp.allclose(o, r, rtol=1e-4, atol=1e-5), (out1, ref1)

    # Case 2: forces the tiled / padded / 2-split accumulation path
    # (N not a multiple of the tile, odd tile count rounded up).
    args2 = _make_inputs(k2, n=100, c_visited=3, c_poi=40)
    out2 = jax.block_until_ready(multi_task_loss(*args2, max_tile_rows=24))
    ref2 = multi_task_loss_ref(*args2)
    for o, r in zip(out2, ref2):
        assert jnp.allclose(o, r, rtol=1e-4, atol=1e-5), (out2, ref2)

    print("KERNEL_OK")
</pallas_src>

<mosaic_0001>
module attributes {stable_mosaic.version = 11 : i64} {
  func.func @kernel(%arg0: i32, %arg1: i32, %arg2: memref<8x2xf32, #tpu.memory_space<vmem>>, %arg3: memref<8x32xf32, #tpu.memory_space<vmem>>, %arg4: memref<8x1xi32, #tpu.memory_space<vmem>>, %arg5: memref<8x1xi32, #tpu.memory_space<vmem>>, %arg6: memref<8x1xf32, #tpu.memory_space<vmem>>, %arg7: memref<8x1xf32, #tpu.memory_space<vmem>>, %arg8: memref<8x1xf32, #tpu.memory_space<vmem>>, %arg9: memref<8x1xf32, #tpu.memory_space<vmem>>, %arg10: memref<1x8x128xf32, #tpu.memory_space<vmem>>) attributes {dimension_semantics = [#tpu.dimension_semantics<parallel>, #tpu.dimension_semantics<arbitrary>], iteration_bounds = array<i64: 1, 1>, scalar_prefetch = 0 : i64, scratch_operands = 0 : i64, tpu.core_type = #tpu.core_type<tc>, window_params = [{transform_indices = @transform_0, window_bounds = array<i64: 8, 2>}, {transform_indices = @transform_1, window_bounds = array<i64: 8, 32>}, {transform_indices = @transform_2, window_bounds = array<i64: 8, 1>}, {transform_indices = @transform_3, window_bounds = array<i64: 8, 1>}, {transform_indices = @transform_4, window_bounds = array<i64: 8, 1>}, {transform_indices = @transform_5, window_bounds = array<i64: 8, 1>}, {transform_indices = @transform_6, window_bounds = array<i64: 8, 1>}, {transform_indices = @transform_7, window_bounds = array<i64: 8, 1>}, {transform_indices = @transform_8, window_bounds = array<i64: 1, 8, 128>}]} {
    %c0_i32 = arith.constant 0 : i32
    %0 = arith.cmpi eq, %arg1, %c0_i32 : i32
    %1 = arith.extui %0 : i1 to i32
    %c0_i32_0 = arith.constant 0 : i32
    %2 = arith.cmpi ne, %1, %c0_i32_0 : i32
    scf.if %2 {
      %cst_40 = arith.constant 0.000000e+00 : f32
      %89 = vector.broadcast %cst_40 : f32 to vector<1x8x128xf32>
      %c0_41 = arith.constant 0 : index
      %c0_42 = arith.constant 0 : index
      %c0_43 = arith.constant 0 : index
      %90 = vector.load %arg10[%c0_41, %c0_42, %c0_43] : memref<1x8x128xf32, #tpu.memory_space<vmem>>, vector<1x8x128xf32>
      tpu.vector_store %arg10[%c0_41, %c0_42, %c0_43], %89 {strides = array<i32>} : memref<1x8x128xf32, #tpu.memory_space<vmem>>, vector<1x8x128xf32>,
    } else {
    }
    %c0 = arith.constant 0 : index
    %c0_1 = arith.constant 0 : index
    %3 = vector.load %arg2[%c0, %c0_1] : memref<8x2xf32, #tpu.memory_space<vmem>>, vector<8x2xf32>
    %cst = arith.constant dense<0xFF800000> : vector<8xf32>
    %4 = vector.multi_reduction <maximumf>, %3, %cst [1] : vector<8x2xf32> to vector<8xf32>
    %5 = vector.shape_cast %4 : vector<8xf32> to vector<8x1xf32>
    %6 = vector.broadcast %5 : vector<8x1xf32> to vector<8x2xf32>
    %7 = arith.subf %3, %6 : vector<8x2xf32>
    %8 = math.exp %7 : vector<8x2xf32>
    %cst_2 = arith.constant dense<0.000000e+00> : vector<8xf32>
    %9 = vector.multi_reduction <add>, %8, %cst_2 [1] : vector<8x2xf32> to vector<8xf32>
    %10 = vector.shape_cast %9 : vector<8xf32> to vector<8x1xf32>
    %11 = tpu.iota {dimensions = array<i32: 1>} : vector<8x2xi32>
    %c0_3 = arith.constant 0 : index
    %c0_4 = arith.constant 0 : index
    %12 = vector.load %arg4[%c0_3, %c0_4] : memref<8x1xi32, #tpu.memory_space<vmem>>, vector<8x1xi32>
    %13 = vector.broadcast %12 : vector<8x1xi32> to vector<8x2xi32>
    %14 = arith.cmpi eq, %11, %13 : vector<8x2xi32>
    %cst_5 = arith.constant 0.000000e+00 : f32
    %15 = vector.broadcast %cst_5 : f32 to vector<8x2xf32>
    %16 = arith.select %14, %7, %15 : vector<8x2xi1>, vector<8x2xf32>
    %cst_6 = arith.constant dense<0.000000e+00> : vector<8xf32>
    %17 = vector.multi_reduction <add>, %16, %cst_6 [1] : vector<8x2xf32> to vector<8xf32>
    %18 = vector.shape_cast %17 : vector<8xf32> to vector<8x1xf32>
    %19 = math.log %10 : vector<8x1xf32>
    %20 = arith.subf %19, %18 : vector<8x1xf32>
    %cst_7 = arith.constant dense<0.000000e+00> : vector<1xf32>
    %21 = vector.multi_reduction <add>, %20, %cst_7 [0] : vector<8x1xf32> to vector<1xf32>
    %22 = vector.shape_cast %21 : vector<1xf32> to vector<1x1xf32>
    %c0_8 = arith.constant 0 : index
    %c0_9 = arith.constant 0 : index
    %23 = vector.load %arg3[%c0_8, %c0_9] : memref<8x32xf32, #tpu.memory_space<vmem>>, vector<8x32xf32>
    %cst_10 = arith.constant dense<0xFF800000> : vector<8xf32>
    %24 = vector.multi_reduction <maximumf>, %23, %cst_10 [1] : vector<8x32xf32> to vector<8xf32>
    %25 = vector.shape_cast %24 : vector<8xf32> to vector<8x1xf32>
    %26 = vector.broadcast %25 : vector<8x1xf32> to vector<8x32xf32>
    %27 = arith.subf %23, %26 : vector<8x32xf32>
    %28 = math.exp %27 : vector<8x32xf32>
    %cst_11 = arith.constant dense<0.000000e+00> : vector<8xf32>
    %29 = vector.multi_reduction <add>, %28, %cst_11 [1] : vector<8x32xf32> to vector<8xf32>
    %30 = vector.shape_cast %29 : vector<8xf32> to vector<8x1xf32>
    %31 = tpu.iota {dimensions = array<i32: 1>} : vector<8x32xi32>
    %c0_12 = arith.constant 0 : index
    %c0_13 = arith.constant 0 : index
    %32 = vector.load %arg5[%c0_12, %c0_13] : memref<8x1xi32, #tpu.memory_space<vmem>>, vector<8x1xi32>
    %33 = vector.broadcast %32 : vector<8x1xi32> to vector<8x32xi32>
    %34 = arith.cmpi eq, %31, %33 : vector<8x32xi32>
    %cst_14 = arith.constant 0.000000e+00 : f32
    %35 = vector.broadcast %cst_14 : f32 to vector<8x32xf32>
    %36 = arith.select %34, %27, %35 : vector<8x32xi1>, vector<8x32xf32>
    %cst_15 = arith.constant dense<0.000000e+00> : vector<8xf32>
    %37 = vector.multi_reduction <add>, %36, %cst_15 [1] : vector<8x32xf32> to vector<8xf32>
    %38 = vector.shape_cast %37 : vector<8xf32> to vector<8x1xf32>
    %39 = math.log %30 : vector<8x1xf32>
    %40 = arith.subf %39, %38 : vector<8x1xf32>
    %cst_16 = arith.constant dense<0.000000e+00> : vector<1xf32>
    %41 = vector.multi_reduction <add>, %40, %cst_16 [0] : vector<8x1xf32> to vector<1xf32>
    %42 = vector.shape_cast %41 : vector<1xf32> to vector<1x1xf32>
    %c0_17 = arith.constant 0 : index
    %c0_18 = arith.constant 0 : index
    %43 = vector.load %arg6[%c0_17, %c0_18] : memref<8x1xf32, #tpu.memory_space<vmem>>, vector<8x1xf32>
    %c0_19 = arith.constant 0 : index
    %c0_20 = arith.constant 0 : index
    %44 = vector.load %arg7[%c0_19, %c0_20] : memref<8x1xf32, #tpu.memory_space<vmem>>, vector<8x1xf32>
    %45 = arith.subf %43, %44 : vector<8x1xf32>
    %46 = math.absf %45 : vector<8x1xf32>
    %cst_21 = arith.constant dense<0.000000e+00> : vector<1xf32>
    %47 = vector.multi_reduction <add>, %46, %cst_21 [0] : vector<8x1xf32> to vector<1xf32>
    %48 = vector.shape_cast %47 : vector<1xf32> to vector<1x1xf32>
    %c0_22 = arith.constant 0 : index
    %c0_23 = arith.constant 0 : index
    %49 = vector.load %arg8[%c0_22, %c0_23] : memref<8x1xf32, #tpu.memory_space<vmem>>, vector<8x1xf32>
    %c0_24 = arith.constant 0 : index
    %c0_25 = arith.constant 0 : index
    %50 = vector.load %arg9[%c0_24, %c0_25] : memref<8x1xf32, #tpu.memory_space<vmem>>, vector<8x1xf32>
    %51 = arith.subf %49, %50 : vector<8x1xf32>
    %52 = math.absf %51 : vector<8x1xf32>
    %cst_26 = arith.constant dense<0.000000e+00> : vector<1xf32>
    %53 = vector.multi_reduction <add>, %52, %cst_26 [0] : vector<8x1xf32> to vector<1xf32>
    %54 = vector.shape_cast %53 : vector<1xf32> to vector<1x1xf32>
    %55 = tpu.iota {dimensions = array<i32: 2>} : vector<1x8x128xi32>
    %c0_27 = arith.constant 0 : index
    %c0_28 = arith.constant 0 : index
    %c0_29 = arith.constant 0 : index
    %56 = vector.load %arg10[%c0_27, %c0_28, %c0_29] : memref<1x8x128xf32, #tpu.memory_space<vmem>>, vector<1x8x128xf32>
    %c0_i32_30 = arith.constant 0 : i32
    %57 = vector.broadcast %c0_i32_30 : i32 to vector<1x8x128xi32>
    %58 = arith.cmpi eq, %55, %57 : vector<1x8x128xi32>
    %cst_31 = arith.constant 0.000000e+00 : f32
    %59 = vector.shape_cast %22 : vector<1x1xf32> to vector<1x1x1xf32>
    %60 = vector.broadcast %59 : vector<1x1x1xf32> to vector<1x8x128xf32>
    %61 = vector.broadcast %cst_31 : f32 to vector<1x8x128xf32>
    %62 = arith.select %58, %60, %61 : vector<1x8x128xi1>, vector<1x8x128xf32>
    %c1_i32 = arith.constant 1 : i32
    %63 = vector.broadcast %c1_i32 : i32 to vector<1x8x128xi32>
    %64 = arith.cmpi eq, %55, %63 : vector<1x8x128xi32>
    %cst_32 = arith.constant 0.000000e+00 : f32
    %65 = vector.shape_cast %48 : vector<1x1xf32> to vector<1x1x1xf32>
    %66 = vector.broadcast %65 : vector<1x1x1xf32> to vector<1x8x128xf32>
    %67 = vector.broadcast %cst_32 : f32 to vector<1x8x128xf32>
    %68 = arith.select %64, %66, %67 : vector<1x8x128xi1>, vector<1x8x128xf32>
    %69 = arith.addf %62, %68 : vector<1x8x128xf32>
    %c2_i32 = arith.constant 2 : i32
    %70 = vector.broadcast %c2_i32 : i32 to vector<1x8x128xi32>
    %71 = arith.cmpi eq, %55, %70 : vector<1x8x128xi32>
    %cst_33 = arith.constant 0.000000e+00 : f32
    %72 = vector.shape_cast %54 : vector<1x1xf32> to vector<1x1x1xf32>
    %73 = vector.broadcast %72 : vector<1x1x1xf32> to vector<1x8x128xf32>
    %74 = vector.broadcast %cst_33 : f32 to vector<1x8x128xf32>
    %75 = arith.select %71, %73, %74 : vector<1x8x128xi1>, vector<1x8x128xf32>
    %76 = arith.addf %69, %75 : vector<1x8x128xf32>
    %c3_i32 = arith.constant 3 : i32
    %77 = vector.broadcast %c3_i32 : i32 to vector<1x8x128xi32>
    %78 = arith.cmpi eq, %55, %77 : vector<1x8x128xi32>
    %cst_34 = arith.constant 0.000000e+00 : f32
    %79 = vector.shape_cast %42 : vector<1x1xf32> to vector<1x1x1xf32>
    %80 = vector.broadcast %79 : vector<1x1x1xf32> to vector<1x8x128xf32>
    %81 = vector.broadcast %cst_34 : f32 to vector<1x8x128xf32>
    %82 = arith.select %78, %80, %81 : vector<1x8x128xi1>, vector<1x8x128xf32>
    %83 = arith.addf %76, %82 : vector<1x8x128xf32>
    %84 = arith.addf %56, %83 : vector<1x8x128xf32>
    %c0_35 = arith.constant 0 : index
    %c0_36 = arith.constant 0 : index
    %c0_37 = arith.constant 0 : index
    %85 = vector.load %arg10[%c0_35, %c0_36, %c0_37] : memref<1x8x128xf32, #tpu.memory_space<vmem>>, vector<1x8x128xf32>
    tpu.vector_store %arg10[%c0_35, %c0_36, %c0_37], %84 {strides = array<i32>} : memref<1x8x128xf32, #tpu.memory_space<vmem>>, vector<1x8x128xf32>,
    %c0_i32_38 = arith.constant 0 : i32
    %86 = arith.cmpi eq, %arg1, %c0_i32_38 : i32
    %87 = arith.extui %86 : i1 to i32
    %c0_i32_39 = arith.constant 0 : i32
    %88 = arith.cmpi ne, %87, %c0_i32_39 : i32
    scf.if %88 {
      %c0_40 = arith.constant 0 : index
      %c0_41 = arith.constant 0 : index
      %c0_42 = arith.constant 0 : index
      %89 = vector.load %arg10[%c0_40, %c0_41, %c0_42] : memref<1x8x128xf32, #tpu.memory_space<vmem>>, vector<1x8x128xf32>
      %cst_43 = arith.constant 1.250000e-01 : f32
      %90 = vector.broadcast %cst_43 : f32 to vector<1x8x128xf32>
      %91 = arith.mulf %89, %90 : vector<1x8x128xf32>
      %c0_44 = arith.constant 0 : index
      %c0_45 = arith.constant 0 : index
      %c0_46 = arith.constant 0 : index
      %92 = vector.load %arg10[%c0_44, %c0_45, %c0_46] : memref<1x8x128xf32, #tpu.memory_space<vmem>>, vector<1x8x128xf32>
      tpu.vector_store %arg10[%c0_44, %c0_45, %c0_46], %91 {strides = array<i32>} : memref<1x8x128xf32, #tpu.memory_space<vmem>>, vector<1x8x128xf32>,
    } else {
    }
    return
  }
  func.func @transform_0(%arg0: i32, %arg1: i32) -> (i32, i32) {
    %c1_i32 = arith.constant 1 : i32
    %0 = arith.muli %arg0, %c1_i32 : i32
    %1 = arith.addi %0, %arg1 : i32
    %c0_i32 = arith.constant 0 : i32
    %c0_i32_0 = arith.constant 0 : i32
    return %1, %c0_i32 : i32, i32
  }
  func.func @transform_1(%arg0: i32, %arg1: i32) -> (i32, i32) {
    %c1_i32 = arith.constant 1 : i32
    %0 = arith.muli %arg0, %c1_i32 : i32
    %1 = arith.addi %0, %arg1 : i32
    %c0_i32 = arith.constant 0 : i32
    %c0_i32_0 = arith.constant 0 : i32
    return %1, %c0_i32 : i32, i32
  }
  func.func @transform_2(%arg0: i32, %arg1: i32) -> (i32, i32) {
    %c1_i32 = arith.constant 1 : i32
    %0 = arith.muli %arg0, %c1_i32 : i32
    %1 = arith.addi %0, %arg1 : i32
    %c0_i32 = arith.constant 0 : i32
    %c0_i32_0 = arith.constant 0 : i32
    return %1, %c0_i32 : i32, i32
  }
  func.func @transform_3(%arg0: i32, %arg1: i32) -> (i32, i32) {
    %c1_i32 = arith.constant 1 : i32
    %0 = arith.muli %arg0, %c1_i32 : i32
    %1 = arith.addi %0, %arg1 : i32
    %c0_i32 = arith.constant 0 : i32
    %c0_i32_0 = arith.constant 0 : i32
    return %1, %c0_i32 : i32, i32
  }
  func.func @transform_4(%arg0: i32, %arg1: i32) -> (i32, i32) {
    %c1_i32 = arith.constant 1 : i32
    %0 = arith.muli %arg0, %c1_i32 : i32
    %1 = arith.addi %0, %arg1 : i32
    %c0_i32 = arith.constant 0 : i32
    %c0_i32_0 = arith.constant 0 : i32
    return %1, %c0_i32 : i32, i32
  }
  func.func @transform_5(%arg0: i32, %arg1: i32) -> (i32, i32) {
    %c1_i32 = arith.constant 1 : i32
    %0 = arith.muli %arg0, %c1_i32 : i32
    %1 = arith.addi %0, %arg1 : i32
    %c0_i32 = arith.constant 0 : i32
    %c0_i32_0 = arith.constant 0 : i32
    return %1, %c0_i32 : i32, i32
  }
  func.func @transform_6(%arg0: i32, %arg1: i32) -> (i32, i32) {
    %c1_i32 = arith.constant 1 : i32
    %0 = arith.muli %arg0, %c1_i32 : i32
    %1 = arith.addi %0, %arg1 : i32
    %c0_i32 = arith.constant 0 : i32
    %c0_i32_0 = arith.constant 0 : i32
    return %1, %c0_i32 : i32, i32
  }
  func.func @transform_7(%arg0: i32, %arg1: i32) -> (i32, i32) {
    %c1_i32 = arith.constant 1 : i32
    %0 = arith.muli %arg0, %c1_i32 : i32
    %1 = arith.addi %0, %arg1 : i32
    %c0_i32 = arith.constant 0 : i32
    %c0_i32_0 = arith.constant 0 : i32
    return %1, %c0_i32 : i32, i32
  }
  func.func @transform_8(%arg0: i32, %arg1: i32) -> (i32, i32, i32) {
    %c0_i32 = arith.constant 0 : i32
    %c0_i32_0 = arith.constant 0 : i32
    %c0_i32_1 = arith.constant 0 : i32
    return %arg0, %c0_i32, %c0_i32_0 : i32, i32, i32
  }
}

</mosaic_0001>

<llo_original>
// kernel: multi_task_loss.1
$region0: #{multi_task_loss.1}
  #allocation0 [shape = 'u32[]', space=smem, size = 0x4, offset = 0x4, fixed_abs, tag = 'smem constant byte address 0x4 - core index']
  #allocation1 [shape = 'u32[144,128]{1,0:T(1,128)}', space=vmem, size = 0x12000, scoped, tag = 'internal scratch']
  %s0 = inlined_call_operand.vmem [shape: f32[8,2], index: 0, kind: input, shape index: {}]
  %s1 = inlined_call_operand.vmem [shape: f32[8,32], index: 1, kind: input, shape index: {}]
  %s2 = inlined_call_operand.vmem [shape: s32[8,1], index: 2, kind: input, shape index: {}]
  %s3 = inlined_call_operand.vmem [shape: s32[8,1], index: 3, kind: input, shape index: {}]
  %s4 = inlined_call_operand.vmem [shape: f32[8,1], index: 4, kind: input, shape index: {}]
  %s5 = inlined_call_operand.vmem [shape: f32[8,1], index: 5, kind: input, shape index: {}]
  %s6 = inlined_call_operand.vmem [shape: f32[8,1], index: 6, kind: input, shape index: {}]
  %s7 = inlined_call_operand.vmem [shape: f32[8,1], index: 7, kind: input, shape index: {}]
  %s8 = inlined_call_operand.vmem [shape: f32[1,8,128], index: 8, kind: output, shape index: {}]
  %s9 = sld [smem:[#allocation0]]
  $region50: #{multi_task_loss.1} parent=0
    _
  %s11 = ssub.s32 1, %s9
  %s12 = scalar_select 0, %s11, %s9
  // Predicated region
  $region2: #{multi_task_loss.1} parent=0 // pred_check
    _
  $region3: #{multi_task_loss.1} parent=0 // pred_check_branch
    %14 = sbr.rel (0) target = $region5
  $region4: #{multi_task_loss.1} parent=0 // pred_region
    %s15 = sadd.s32 0, 0
    %p16 = scmp.lt.s32.totalorder %s15, 0
    %s17 = scalar_select %p16, %s15, 0
    %s18 = smul.addr %s17, 8
    %s19 = scalar_lea.vmem %s0, %s18
    %s20 = sadd.s32 0, 0
  $region5: #{multi_task_loss.1} parent=0 // pred_fallthru
    _
  // Predicated region
  $region6: #{multi_task_loss.1} parent=0 // pred_check
    _
  $region7: #{multi_task_loss.1} parent=0 // pred_check_branch
    %22 = sbr.rel (0) target = $region9
  $region8: #{multi_task_loss.1} parent=0 // pred_region
    %s23 = sadd.s32 0, 0
    %p24 = scmp.lt.s32.totalorder %s23, 0
    %s25 = scalar_select %p24, %s23, 0
    %s26 = smul.addr %s25, 8
    %s27 = scalar_lea.vmem %s1, %s26
    %s28 = sadd.s32 0, 0
  $region9: #{multi_task_loss.1} parent=0 // pred_fallthru
    _
  // Predicated region
  $region10: #{multi_task_loss.1} parent=0 // pred_check
    _
  $region11: #{multi_task_loss.1} parent=0 // pred_check_branch
    %30 = sbr.rel (0) target = $region13
  $region12: #{multi_task_loss.1} parent=0 // pred_region
    %s31 = sadd.s32 0, 0
    %p32 = scmp.lt.s32.totalorder %s31, 0
    %s33 = scalar_select %p32, %s31, 0
    %s34 = smul.addr %s33, 8
    %s35 = scalar_lea.vmem %s2, %s34
    %s36 = sadd.s32 0, 0
  $region13: #{multi_task_loss.1} parent=0 // pred_fallthru
    _
  // Predicated region
  $region14: #{multi_task_loss.1} parent=0 // pred_check
    _
  $region15: #{multi_task_loss.1} parent=0 // pred_check_branch
    %38 = sbr.rel (0) target = $region17
  $region16: #{multi_task_loss.1} parent=0 // pred_region
    %s39 = sadd.s32 0, 0
    %p40 = scmp.lt.s32.totalorder %s39, 0
    %s41 = scalar_select %p40, %s39, 0
    %s42 = smul.addr %s41, 8
    %s43 = scalar_lea.vmem %s3, %s42
    %s44 = sadd.s32 0, 0
  $region17: #{multi_task_loss.1} parent=0 // pred_fallthru
    _
  // Predicated region
  $region18: #{multi_task_loss.1} parent=0 // pred_check
    _
  $region19: #{multi_task_loss.1} parent=0 // pred_check_branch
    %46 = sbr.rel (0) target = $region21
  $region20: #{multi_task_loss.1} parent=0 // pred_region
    %s47 = sadd.s32 0, 0
    %p48 = scmp.lt.s32.totalorder %s47, 0
    %s49 = scalar_select %p48, %s47, 0
    %s50 = smul.addr %s49, 8
    %s51 = scalar_lea.vmem %s4, %s50
    %s52 = sadd.s32 0, 0
  $region21: #{multi_task_loss.1} parent=0 // pred_fallthru
    _
  // Predicated region
  $region22: #{multi_task_loss.1} parent=0 // pred_check
    _
  $region23: #{multi_task_loss.1} parent=0 // pred_check_branch
    %54 = sbr.rel (0) target = $region25
  $region24: #{multi_task_loss.1} parent=0 // pred_region
    %s55 = sadd.s32 0, 0
    %p56 = scmp.lt.s32.totalorder %s55, 0
    %s57 = scalar_select %p56, %s55, 0
    %s58 = smul.addr %s57, 8
    %s59 = scalar_lea.vmem %s5, %s58
    %s60 = sadd.s32 0, 0
  $region25: #{multi_task_loss.1} parent=0 // pred_fallthru
    _
  // Predicated region
  $region26: #{multi_task_loss.1} parent=0 // pred_check
    _
  $region27: #{multi_task_loss.1} parent=0 // pred_check_branch
    %62 = sbr.rel (0) target = $region29
  $region28: #{multi_task_loss.1} parent=0 // pred_region
    %s63 = sadd.s32 0, 0
    %p64 = scmp.lt.s32.totalorder %s63, 0
    %s65 = scalar_select %p64, %s63, 0
    %s66 = smul.addr %s65, 8
    %s67 = scalar_lea.vmem %s6, %s66
    %s68 = sadd.s32 0, 0
  $region29: #{multi_task_loss.1} parent=0 // pred_fallthru
    _
  // Predicated region
  $region30: #{multi_task_loss.1} parent=0 // pred_check
    _
  $region31: #{multi_task_loss.1} parent=0 // pred_check_branch
    %70 = sbr.rel (0) target = $region33
  $region32: #{multi_task_loss.1} parent=0 // pred_region
    %s71 = sadd.s32 0, 0
    %p72 = scmp.lt.s32.totalorder %s71, 0
    %s73 = scalar_select %p72, %s71, 0
    %s74 = smul.addr %s73, 8
    %s75 = scalar_lea.vmem %s7, %s74
    %s76 = sadd.s32 0, 0
  $region33: #{multi_task_loss.1} parent=0 // pred_fallthru
    _
  %s77 = sadd.s32 0, 0
  %p78 = scmp.lt.s32.totalorder %s77, 0
  %s79 = scalar_select %p78, %s77, 0
  %s80 = smul.addr %s79, 8
  %s81 = scalar_lea.vmem %s0, %s80
  %s82 = sadd.s32 0, 0
  %p83 = scmp.lt.s32.totalorder %s82, 0
  %s84 = scalar_select %p83, %s82, 0
  %s85 = smul.addr %s84, 8
  %s86 = scalar_lea.vmem %s1, %s85
  %s87 = sadd.s32 0, 0
  %p88 = scmp.lt.s32.totalorder %s87, 0
  %s89 = scalar_select %p88, %s87, 0
  %s90 = smul.addr %s89, 8
  %s91 = scalar_lea.vmem %s2, %s90
  %s92 = sadd.s32 0, 0
  %p93 = scmp.lt.s32.totalorder %s92, 0
  %s94 = scalar_select %p93, %s92, 0
  %s95 = smul.addr %s94, 8
  %s96 = scalar_lea.vmem %s3, %s95
  %s97 = sadd.s32 0, 0
  %p98 = scmp.lt.s32.totalorder %s97, 0
  %s99 = scalar_select %p98, %s97, 0
  %s100 = smul.addr %s99, 8
  %s101 = scalar_lea.vmem %s4, %s100
  %s102 = sadd.s32 0, 0
  %p103 = scmp.lt.s32.totalorder %s102, 0
  %s104 = scalar_select %p103, %s102, 0
  %s105 = smul.addr %s104, 8
  %s106 = scalar_lea.vmem %s5, %s105
  %s107 = sadd.s32 0, 0
  %p108 = scmp.lt.s32.totalorder %s107, 0
  %s109 = scalar_select %p108, %s107, 0
  %s110 = smul.addr %s109, 8
  %s111 = scalar_lea.vmem %s6, %s110
  %s112 = sadd.s32 0, 0
  %p113 = scmp.lt.s32.totalorder %s112, 0
  %s114 = scalar_select %p113, %s112, 0
  %s115 = smul.addr %s114, 8
  %s116 = scalar_lea.vmem %s7, %s115
  %s117 = sadd.s32 0, 0
  %p118 = scmp.lt.s32.totalorder %s117, 0
  %s119 = scalar_select %p118, %s117, 0
  %s120 = smul.addr %s119, 8
  %s121 = scalar_lea.vmem %s0, %s120
  %s122 = sadd.s32 0, 0
  %s123 = sadd.s32 0, 0
  %p124 = scmp.lt.s32.totalorder %s123, 0
  %s125 = scalar_select %p124, %s123, 0
  %s126 = smul.addr %s125, 8
  %s127 = scalar_lea.vmem %s1, %s126
  %s128 = sadd.s32 0, 0
  %s129 = sadd.s32 0, 0
  %p130 = scmp.lt.s32.totalorder %s129, 0
  %s131 = scalar_select %p130, %s129, 0
  %s132 = smul.addr %s131, 8
  %s133 = scalar_lea.vmem %s2, %s132
  %s134 = sadd.s32 0, 0
  %s135 = sadd.s32 0, 0
  %p136 = scmp.lt.s32.totalorder %s135, 0
  %s137 = scalar_select %p136, %s135, 0
  %s138 = smul.addr %s137, 8
  %s139 = scalar_lea.vmem %s3, %s138
  %s140 = sadd.s32 0, 0
  %s141 = sadd.s32 0, 0
  %p142 = scmp.lt.s32.totalorder %s141, 0
  %s143 = scalar_select %p142, %s141, 0
  %s144 = smul.addr %s143, 8
  %s145 = scalar_lea.vmem %s4, %s144
  %s146 = sadd.s32 0, 0
  %s147 = sadd.s32 0, 0
  %p148 = scmp.lt.s32.totalorder %s147, 0
  %s149 = scalar_select %p148, %s147, 0
  %s150 = smul.addr %s149, 8
  %s151 = scalar_lea.vmem %s5, %s150
  %s152 = sadd.s32 0, 0
  %s153 = sadd.s32 0, 0
  %p154 = scmp.lt.s32.totalorder %s153, 0
  %s155 = scalar_select %p154, %s153, 0
  %s156 = smul.addr %s155, 8
  %s157 = scalar_lea.vmem %s6, %s156
  %s158 = sadd.s32 0, 0
  %s159 = sadd.s32 0, 0
  %p160 = scmp.lt.s32.totalorder %s159, 0
  %s161 = scalar_select %p160, %s159, 0
  %s162 = smul.addr %s161, 8
  %s163 = scalar_lea.vmem %s7, %s162
  %s164 = sadd.s32 0, 0
  %p165 = scmp.eq.s32.totalorder 0, 0
  // Predicated region
  $region34: #{multi_task_loss.1} parent=0 // pred_check
    %p166 = pneg %p165
  $region35: #{multi_task_loss.1} parent=0 // pred_check_branch
    %168 = sbr.rel (%p166) target = $region37
  $region36: #{multi_task_loss.1} parent=0 // pred_region
    %169 = vst [vmem:[%s8] sm:$0xff] 0.0
  $region37: #{multi_task_loss.1} parent=0 // pred_fallthru
    _
  %v170 = vld [vmem:[%s121] sm:$0xff]
  %vm171 = vcmask 15360
  %v172 = vsel %vm171, %v170, -inf
  %173 = vmax.xlane.f32.xlu0 %v172
  %v174 = vpop.xlane.xlu0 %173
  %v175 = vsub.f32 %v170, %v174
  %v176 = vmul.f32 %v175, 1.442695
  %v177 = vpow.pop %v176
  %v178 = vsel %vm171, %v177, 0.0
  %179 = vadd.xlane.f32.xlu0 %v178
  %v180 = vpop.xlane.xlu0 %179
  %v181 = vlaneseq
  %v182 = vand.u32 %v181, 127
  %v183 = vld [vmem:[%s133] sm:$0xff]
  %184 = vset.pattern.permute.xlu0 0
  %185 = vperm.xlu0 %184, %v183
  %v186 = vpop.permute.xlu0 %185
  %vm187 = vcmp.eq.s32.totalorder %v182, %v186
  %v188 = vsel %vm187, %v175, 0.0
  %v189 = vsel %vm171, %v188, 0.0
  %190 = vadd.xlane.f32.xlu0 %v189
  %v191 = vpop.xlane.xlu0 %190
  %v192 = vlog2.pop %v180
  %v193 = vmul.f32 %v192, 0.6931472
  %v194 = vsub.f32 %v193, %v191
  %v195 = vrot.slane %v194, 4
  %v196 = vadd.f32 %v194, %v195
  %v197 = vrot.slane %v196, 2
  %v198 = vadd.f32 %v196, %v197
  %v199 = vrot.slane %v198, 1
  %v200 = vadd.f32 %v198, %v199
  %v201 = vld [vmem:[%s127] sm:$0xff]
  %vm202 = vcmask 261120
  %v203 = vsel %vm202, %v201, -inf
  %204 = vmax.xlane.f32.xlu0 %v203
  %v205 = vpop.xlane.xlu0 %204
  %v206 = vsub.f32 %v201, %v205
  %v207 = vmul.f32 %v206, 1.442695
  %v208 = vpow.pop %v207
  %v209 = vsel %vm202, %v208, 0.0
  %210 = vadd.xlane.f32.xlu0 %v209
  %v211 = vpop.xlane.xlu0 %210
  %v212 = vld [vmem:[%s139] sm:$0xff]
  %213 = vset.pattern.permute.xlu0 0
  %214 = vperm.xlu0 %213, %v212
  %v215 = vpop.permute.xlu0 %214
  %vm216 = vcmp.eq.s32.totalorder %v182, %v215
  %v217 = vsel %vm216, %v206, 0.0
  %v218 = vsel %vm202, %v217, 0.0
  %219 = vadd.xlane.f32.xlu0 %v218
  %v220 = vpop.xlane.xlu0 %219
  %v221 = vlog2.pop %v211
  %v222 = vmul.f32 %v221, 0.6931472
  %v223 = vsub.f32 %v222, %v220
  %v224 = vrot.slane %v223, 4
  %v225 = vadd.f32 %v223, %v224
  %v226 = vrot.slane %v225, 2
  %v227 = vadd.f32 %v225, %v226
  %v228 = vrot.slane %v227, 1
  %v229 = vadd.f32 %v227, %v228
  %v230 = vld [vmem:[%s145] sm:$0xff]
  %v231 = vld [vmem:[%s151] sm:$0xff]
  %v232 = vsub.f32 %v230, %v231
  %v233 = vand.u32 2147483647, %v232
  %vm234 = vcmask 7168
  %v235 = vsel %vm234, %v233, 0.0
  %v236 = vrot.slane %v235, 4
  %v237 = vadd.f32 %v235, %v236
  %v238 = vrot.slane %v237, 2
  %v239 = vadd.f32 %v237, %v238
  %v240 = vrot.slane %v239, 1
  %v241 = vadd.f32 %v239, %v240
  %v242 = vld [vmem:[%s157] sm:$0xff]
  %v243 = vld [vmem:[%s163] sm:$0xff]
  %v244 = vsub.f32 %v242, %v243
  %v245 = vand.u32 2147483647, %v244
  %v246 = vsel %vm234, %v245, 0.0
  %v247 = vrot.slane %v246, 4
  %v248 = vadd.f32 %v246, %v247
  %v249 = vrot.slane %v248, 2
  %v250 = vadd.f32 %v248, %v249
  %v251 = vrot.slane %v250, 1
  %v252 = vadd.f32 %v250, %v251
  %v253 = vld [vmem:[%s8] sm:$0xff]
  %vm254 = vcmp.eq.s32.totalorder %v182, 0
  %v255 = vsel %vm254, %v200, 0.0
  %vm256 = vcmp.eq.s32.totalorder %v182, 1
  %258 = vset.pattern.permute.xlu0 0
  %259 = vperm.xlu0 %258, %v241
  %v260 = vpop.permute.xlu0 %259
  %v262 = vsel %vm256, %v260, 0.0
  %v263 = vadd.f32 %v255, %v262
  %vm264 = vcmp.eq.s32.totalorder %v182, 2
  %266 = vset.pattern.permute.xlu0 0
  %267 = vperm.xlu0 %266, %v252
  %v268 = vpop.permute.xlu0 %267
  %v270 = vsel %vm264, %v268, 0.0
  %v271 = vadd.f32 %v263, %v270
  %vm272 = vcmp.eq.s32.totalorder %v182, 3
  %v273 = vsel %vm272, %v229, 0.0
  %v274 = vadd.f32 %v271, %v273
  %v275 = vadd.f32 %v253, %v274
  %276 = vst [vmem:[%s8] sm:$0xff] %v275
  // Predicated region
  $region38: #{multi_task_loss.1} parent=0 // pred_check
    %p277 = pneg %p165
  $region39: #{multi_task_loss.1} parent=0 // pred_check_branch
    %279 = sbr.rel (%p277) target = $region41
  $region40: #{multi_task_loss.1} parent=0 // pred_region
    %v280 = vld [vmem:[%s8] sm:$0xff]
    %v281 = vmul.f32 %v280, 0.125
    %282 = vst [vmem:[%s8] sm:$0xff] %v281
  $region41: #{multi_task_loss.1} parent=0 // pred_fallthru
    _
  // Predicated region
  $region42: #{multi_task_loss.1} parent=0 // pred_check
    _
  $region43: #{multi_task_loss.1} parent=0 // pred_check_branch
    %284 = sbr.rel (0) target = $region45
  $region44: #{multi_task_loss.1} parent=0 // pred_region
    _
  $region45: #{multi_task_loss.1} parent=0 // pred_fallthru
    _
  // Predicated region
  $region46: #{multi_task_loss.1} parent=0 // pred_check
    _
  $region47: #{multi_task_loss.1} parent=0 // pred_check_branch
    %286 = sbr.rel (0) target = $region49
  $region48: #{multi_task_loss.1} parent=0 // pred_region
    _
  $region49: #{multi_task_loss.1} parent=0 // pred_fallthru
    _

</llo_original>
